<compile_context>
chip_gen: v5e
topology: v5e:2x2
jax: 0.10.0
libtpu: 0.0.40
codegen_flags: <defaults>
</compile_context>

<pallas_src>
import functools

import numpy as np
import jax
import jax.numpy as jnp
from jax.experimental import pallas as pl
from jax.experimental.pallas import tpu as pltpu


_LN_EPS = 1e-5  # torch.nn.LayerNorm default


def _layernorm(x, gamma, beta):
    mu = jnp.mean(x, axis=-1, keepdims=True)
    var = jnp.mean(jnp.square(x - mu), axis=-1, keepdims=True)
    return (x - mu) * jax.lax.rsqrt(var + _LN_EPS) * gamma + beta


# ---------------------------------------------------------------------------
# Kernel 1: fused MLP (all Linear layers + ReLU) + optional trailing LayerNorm
# ---------------------------------------------------------------------------
def _fused_mlp_kernel(*refs, nlayers, has_ln):
    x = refs[0][...]
    o_ref = refs[-1]
    idx = 1
    for layer in range(nlayers):
        w = refs[idx][...]
        b = refs[idx + 1][...]
        idx += 2
        x = jnp.dot(x, w, preferred_element_type=jnp.float32) + b
        if layer < nlayers - 1:
            x = jnp.maximum(x, 0.0)
    if has_ln:
        x = _layernorm(x, refs[idx][...], refs[idx + 1][...])
    o_ref[...] = x


def fused_mlp(x, layers, ln=None, *, row_tile=1024):
    """Apply an MLP (list of (W, b)) + optional LayerNorm in one pallas_call."""
    rows, in_f = x.shape
    out_f = layers[-1][0].shape[1]
    tm = rows if rows <= row_tile else row_tile   # full block OR big 8-aligned tile
    grid = (pl.cdiv(rows, tm),)

    operands = [x]
    in_specs = [pl.BlockSpec((tm, in_f), lambda i: (i, 0))]
    for w, b in layers:
        fi, fo = w.shape
        operands += [w, b.reshape(1, fo)]
        in_specs += [pl.BlockSpec((fi, fo), lambda i: (0, 0)),
                     pl.BlockSpec((1, fo), lambda i: (0, 0))]
    if ln is not None:
        g, bt = ln
        operands += [g.reshape(1, out_f), bt.reshape(1, out_f)]
        in_specs += [pl.BlockSpec((1, out_f), lambda i: (0, 0)),
                     pl.BlockSpec((1, out_f), lambda i: (0, 0))]

    return pl.pallas_call(
        functools.partial(_fused_mlp_kernel, nlayers=len(layers),
                          has_ln=ln is not None),
        out_shape=jax.ShapeDtypeStruct((rows, out_f), jnp.float32),
        grid=grid,
        in_specs=in_specs,
        out_specs=pl.BlockSpec((tm, out_f), lambda i: (i, 0)),
        compiler_params=pltpu.CompilerParams(dimension_semantics=("parallel",)),
    )(*operands)


# ---------------------------------------------------------------------------
# Kernel 2: fused InteractionNetwork step
#   edge MLP (split first layer, no msg_in concat) + edge LayerNorm
#   + masked sender aggregation + edge residual
#   + node MLP (split first layer over [aggr, x]) + node LayerNorm + node residual
# ---------------------------------------------------------------------------
def _processor_step_kernel(*refs, tr, nsend, latent, n_edge_rest, n_node_rest):
    node_all_ref, node_r_ref, edge_ref, mask_ref = refs[0:4]
    idx = 4
    w0r = refs[idx][...]; w0s = refs[idx + 1][...]
    w0e = refs[idx + 2][...]; b0 = refs[idx + 3][...]
    idx += 4
    edge_rest = refs[idx: idx + 2 * n_edge_rest]; idx += 2 * n_edge_rest
    g_e = refs[idx][...]; be = refs[idx + 1][...]; idx += 2
    wna = refs[idx][...]; wnx = refs[idx + 1][...]; bn0 = refs[idx + 2][...]
    idx += 3
    node_rest = refs[idx: idx + 2 * n_node_rest]; idx += 2 * n_node_rest
    g_n = refs[idx][...]; bn = refs[idx + 1][...]; idx += 2
    node_out_ref = refs[idx]
    edge_out_ref = refs[idx + 1]

    x_all = node_all_ref[...]                 # (NS, L)  senders (VMEM resident)
    x_r = node_r_ref[...]                     # (TR, L)  receiver tile
    e = edge_ref[...]                         # (TR*NS, L)
    m = mask_ref[...]                         # (TR, NS)

    # --- edge (message) MLP: first layer via split weights (no concat) ---
    t_r = jnp.dot(x_r, w0r, preferred_element_type=jnp.float32)    # (TR, H)
    t_s = jnp.dot(x_all, w0s, preferred_element_type=jnp.float32)  # (NS, H)
    t_e = jnp.dot(e, w0e, preferred_element_type=jnp.float32) + b0 # (TR*NS, H)
    hidden = t_e.shape[-1]
    h = t_e.reshape(tr, nsend, hidden) + t_r[:, None, :] + t_s[None, :, :]
    if n_edge_rest > 0:
        h = jnp.maximum(h, 0.0)
    h = h.reshape(tr * nsend, hidden)
    for li in range(n_edge_rest):
        w = edge_rest[2 * li][...]
        b = edge_rest[2 * li + 1][...]
        h = jnp.dot(h, w, preferred_element_type=jnp.float32) + b
        if li < n_edge_rest - 1:
            h = jnp.maximum(h, 0.0)
    new_edge = _layernorm(h, g_e, be)                               # (TR*NS, L)

    # --- masked "add" aggregation over senders (pre-residual message) ---
    ne3 = new_edge.reshape(tr, nsend, latent)
    aggr = jnp.sum(m[:, :, None] * ne3, axis=1)                     # (TR, L)

    # --- edge residual ---
    edge_out_ref[...] = e + new_edge

    # --- node MLP: first layer split over concat([aggr, x]) ---
    hn = (jnp.dot(aggr, wna, preferred_element_type=jnp.float32)
          + jnp.dot(x_r, wnx, preferred_element_type=jnp.float32) + bn0)
    if n_node_rest > 0:
        hn = jnp.maximum(hn, 0.0)
    for li in range(n_node_rest):
        w = node_rest[2 * li][...]
        b = node_rest[2 * li + 1][...]
        hn = jnp.dot(hn, w, preferred_element_type=jnp.float32) + b
        if li < n_node_rest - 1:
            hn = jnp.maximum(hn, 0.0)
    new_node = _layernorm(hn, g_n, bn)
    node_out_ref[...] = x_r + new_node


def processor_step(node_lat, edge_lat, mask, step_params, *,
                   vmem_budget_bytes=8 << 20):
    n, latent = node_lat.shape
    edge_layers = step_params["edge_mlp"]
    node_layers = step_params["node_mlp"]
    g_e, b_e = step_params["edge_ln"]
    g_n, b_n = step_params["node_ln"]

    w0, b0 = edge_layers[0]
    w0r, w0s, w0e = w0[:latent], w0[latent:2 * latent], w0[2 * latent:]
    wn0, bn0 = node_layers[0]
    wna, wnx = wn0[:latent], wn0[latent:]
    hidden = w0.shape[1]

    # Receiver tile: each tile carries a full sender row (n) of edges + hidden
    # activations. Budget conservatively so it also fits v7x / v5e scoped VMEM.
    bytes_per_recv_row = n * latent * 4 * 6 + n * hidden * 4 * 2
    if n * bytes_per_recv_row <= vmem_budget_bytes:
        tr = n
    else:
        tr = max(8, (vmem_budget_bytes // bytes_per_recv_row) // 8 * 8)
        tr = min(tr, n)
    grid = (pl.cdiv(n, tr),)
    # TODO(synk): kernel assumes nparticles is a multiple of 8 (vreg sublane
    # alignment of the in-kernel (TR*N, F)<->(TR, N, F) reshapes); pad if not.

    operands = [node_lat, node_lat, edge_lat, mask,
                w0r, w0s, w0e, b0.reshape(1, hidden)]
    in_specs = [
        pl.BlockSpec((n, latent), lambda i: (0, 0)),        # full node_lat (senders)
        pl.BlockSpec((tr, latent), lambda i: (i, 0)),       # receiver tile
        pl.BlockSpec((tr * n, latent), lambda i: (i, 0)),   # edge tile (rows r*n+s)
        pl.BlockSpec((tr, n), lambda i: (i, 0)),            # adjacency mask tile
        pl.BlockSpec(w0r.shape, lambda i: (0, 0)),
        pl.BlockSpec(w0s.shape, lambda i: (0, 0)),
        pl.BlockSpec(w0e.shape, lambda i: (0, 0)),
        pl.BlockSpec((1, hidden), lambda i: (0, 0)),
    ]
    for w, b in edge_layers[1:]:
        operands += [w, b.reshape(1, w.shape[1])]
        in_specs += [pl.BlockSpec(w.shape, lambda i: (0, 0)),
                     pl.BlockSpec((1, w.shape[1]), lambda i: (0, 0))]
    operands += [g_e.reshape(1, latent), b_e.reshape(1, latent),
                 wna, wnx, bn0.reshape(1, hidden)]
    in_specs += [pl.BlockSpec((1, latent), lambda i: (0, 0)),
                 pl.BlockSpec((1, latent), lambda i: (0, 0)),
                 pl.BlockSpec(wna.shape, lambda i: (0, 0)),
                 pl.BlockSpec(wnx.shape, lambda i: (0, 0)),
                 pl.BlockSpec((1, hidden), lambda i: (0, 0))]
    for w, b in node_layers[1:]:
        operands += [w, b.reshape(1, w.shape[1])]
        in_specs += [pl.BlockSpec(w.shape, lambda i: (0, 0)),
                     pl.BlockSpec((1, w.shape[1]), lambda i: (0, 0))]
    operands += [g_n.reshape(1, latent), b_n.reshape(1, latent)]
    in_specs += [pl.BlockSpec((1, latent), lambda i: (0, 0)),
                 pl.BlockSpec((1, latent), lambda i: (0, 0))]

    new_node, new_edge = pl.pallas_call(
        functools.partial(_processor_step_kernel, tr=tr, nsend=n, latent=latent,
                          n_edge_rest=len(edge_layers) - 1,
                          n_node_rest=len(node_layers) - 1),
        out_shape=(jax.ShapeDtypeStruct((n, latent), jnp.float32),
                   jax.ShapeDtypeStruct((n * n, latent), jnp.float32)),
        grid=grid,
        in_specs=in_specs,
        out_specs=(pl.BlockSpec((tr, latent), lambda i: (i, 0)),
                   pl.BlockSpec((tr * n, latent), lambda i: (i, 0))),
        compiler_params=pltpu.CompilerParams(dimension_semantics=("parallel",)),
    )(*operands)
    return new_node, new_edge


# ---------------------------------------------------------------------------
# Parameter init (deterministic, PyTorch-style defaults)
# ---------------------------------------------------------------------------
def _init_linear(key, fan_in, fan_out):
    k_w, k_b = jax.random.split(key)
    bound = 1.0 / np.sqrt(fan_in)
    w = jax.random.uniform(k_w, (fan_in, fan_out), jnp.float32, -bound, bound)
    b = jax.random.uniform(k_b, (fan_out,), jnp.float32, -bound, bound)
    return w, b


def _init_mlp(key, sizes):
    layers = []
    for i in range(len(sizes) - 1):
        key, sub = jax.random.split(key)
        layers.append(_init_linear(sub, sizes[i], sizes[i + 1]))
    return layers


def _init_ln(f):
    return jnp.ones((f,), jnp.float32), jnp.zeros((f,), jnp.float32)


# ---------------------------------------------------------------------------
# LearnedSimulator (JAX / Pallas version)
# ---------------------------------------------------------------------------
class LearnedSimulatorPallas:
    def __init__(self, aggregate_mode, particle_dimensions, nnode_in, nedge_in,
                 latent_dim, nmessage_passing_steps, nmlp_layers, mlp_hidden_dim,
                 connectivity_radius, boundaries, normalization_stats,
                 nparticle_types, particle_type_embedding_size,
                 boundary_clamp_limit=1.0, seed=0):
        assert aggregate_mode in ("add", "sum")  # TODO(synk): 'mean'/'max' aggregation not implemented.
        self._boundaries = np.asarray(boundaries, np.float32)
        self._connectivity_radius = float(connectivity_radius)
        self._normalization_stats = normalization_stats
        self._nparticle_types = nparticle_types
        self._boundary_clamp_limit = float(boundary_clamp_limit)
        self._latent_dim = latent_dim

        key = jax.random.PRNGKey(seed)
        k_emb, k_nenc, k_eenc, k_dec, k_proc = jax.random.split(key, 5)
        hidden = [mlp_hidden_dim] * nmlp_layers

        params = {}
        params["type_embedding"] = jax.random.normal(
            k_emb, (nparticle_types, particle_type_embedding_size), jnp.float32)
        params["node_encoder"] = _init_mlp(k_nenc, [nnode_in] + hidden + [latent_dim])
        params["node_encoder_ln"] = _init_ln(latent_dim)
        params["edge_encoder"] = _init_mlp(k_eenc, [nedge_in] + hidden + [latent_dim])
        params["edge_encoder_ln"] = _init_ln(latent_dim)
        proc = []
        pkeys = jax.random.split(k_proc, nmessage_passing_steps * 2)
        for s in range(nmessage_passing_steps):
            proc.append({
                "edge_mlp": _init_mlp(pkeys[2 * s], [3 * latent_dim] + hidden + [latent_dim]),
                "edge_ln": _init_ln(latent_dim),
                "node_mlp": _init_mlp(pkeys[2 * s + 1], [2 * latent_dim] + hidden + [latent_dim]),
                "node_ln": _init_ln(latent_dim),
            })
        params["processor"] = proc
        params["decoder"] = _init_mlp(k_dec, [latent_dim] + hidden + [particle_dimensions])
        self.params = params

    def predict_positions(self, position_sequence, nparticles_per_example,
                          particle_types, material_property=None):
        p = self.params
        N, seq, D = position_sequence.shape
        recent = position_sequence[:, -1]
        prev = position_sequence[:, -2]

        # ---- node features (tiny, plain JAX per perf review) ----
        vel = position_sequence[:, 1:] - position_sequence[:, :-1]
        vstats = self._normalization_stats["velocity"]
        vmean = jnp.asarray(vstats["mean"], jnp.float32).reshape(1, 1, D)
        vstd = jnp.asarray(vstats["std"], jnp.float32).reshape(1, 1, D)
        flat_vel = ((vel - vmean) / vstd).reshape(N, (seq - 1) * D)
        lower = jnp.asarray(self._boundaries[:, 0], jnp.float32).reshape(1, D)
        upper = jnp.asarray(self._boundaries[:, 1], jnp.float32).reshape(1, D)
        dist = jnp.concatenate([recent - lower, upper - recent], axis=1)
        dist = jnp.clip(dist / self._connectivity_radius,
                        -self._boundary_clamp_limit, self._boundary_clamp_limit)
        feats = [flat_vel, dist]
        if self._nparticle_types > 1:
            feats.append(jnp.take(p["type_embedding"], particle_types, axis=0))
        if material_property is not None:
            feats.append(jnp.asarray(material_property, jnp.float32).reshape(N, 1))
        node_features = jnp.concatenate(feats, axis=-1)

        # ---- dense radius graph + edge features (== radius_graph, loop=True) ----
        # TODO(synk): max_num_neighbors=128 truncation of radius_graph not enforced.
        batch_ids = jnp.asarray(
            np.concatenate([np.full(int(n), i, np.int32)
                            for i, n in enumerate(nparticles_per_example)]))
        disp = recent[None, :, :] - recent[:, None, :]      # [receiver, sender, D]
        d2 = jnp.sum(disp * disp, axis=-1)
        same = batch_ids[:, None] == batch_ids[None, :]
        mask = ((d2 <= self._connectivity_radius ** 2) & same).astype(jnp.float32)

        rel = disp / self._connectivity_radius              # normalized relative displacements
        rel_norm = jnp.sqrt(jnp.sum(rel * rel, axis=-1, keepdims=True))
        edge_features = jnp.concatenate([rel, rel_norm], axis=-1).reshape(N * N, D + 1)

        # ---- Encode (one fused kernel each: MLP + LayerNorm) ----
        node_lat = fused_mlp(node_features, p["node_encoder"], p["node_encoder_ln"])
        edge_lat = fused_mlp(edge_features, p["edge_encoder"], p["edge_encoder_ln"])

        # ---- Process (one fused kernel per InteractionNetwork step) ----
        for step in p["processor"]:
            node_lat, edge_lat = processor_step(node_lat, edge_lat, mask, step)

        # ---- Decode (fused MLP, no LayerNorm) ----
        norm_acc = fused_mlp(node_lat, p["decoder"], ln=None)

        # ---- Post-process (tiny [N, D] elementwise, plain JAX per perf review) ----
        astats = self._normalization_stats["acceleration"]
        acc = (norm_acc * jnp.asarray(astats["std"], jnp.float32).reshape(1, D)
               + jnp.asarray(astats["mean"], jnp.float32).reshape(1, D))
        new_vel = (recent - prev) + acc
        return recent + new_vel


# ---------------------------------------------------------------------------
if __name__ == "__main__":
    N_PER_EXAMPLE = (32, 32)           # 2 examples per batch
    N = sum(N_PER_EXAMPLE)
    DIM = 2
    SEQ = 6                            # current + last 5 positions
    LATENT = 32
    HIDDEN = 32
    EMBED = 16

    boundaries = np.array([[0.0, 1.0], [0.0, 1.0]], dtype=np.float32)
    stats = {
        "velocity": {"mean": np.zeros(DIM, np.float32), "std": np.full(DIM, 0.05, np.float32)},
        "acceleration": {"mean": np.zeros(DIM, np.float32), "std": np.full(DIM, 0.01, np.float32)},
    }

    sim = LearnedSimulatorPallas(
        aggregate_mode="add",
        particle_dimensions=DIM,
        nnode_in=(SEQ - 1) * DIM + 2 * DIM + EMBED,   # 10 + 4 + 16 = 30
        nedge_in=DIM + 1,                             # 3
        latent_dim=LATENT,
        nmessage_passing_steps=2,
        nmlp_layers=2,
        mlp_hidden_dim=HIDDEN,
        connectivity_radius=0.3,
        boundaries=boundaries,
        normalization_stats=stats,
        nparticle_types=3,
        particle_type_embedding_size=EMBED,
        boundary_clamp_limit=1.0,
        seed=0,
    )

    key = jax.random.PRNGKey(0)
    k_pos, k_drift, k_type = jax.random.split(key, 3)
    base_pos = jax.random.uniform(k_pos, (N, 1, DIM), jnp.float32)
    drift = 0.01 * jax.random.normal(k_drift, (N, SEQ, DIM), jnp.float32)
    position_sequence = jnp.clip(base_pos + jnp.cumsum(drift, axis=1), 0.0, 1.0)
    particle_types = jax.random.randint(k_type, (N,), 0, 3)

    next_positions = sim.predict_positions(position_sequence, N_PER_EXAMPLE, particle_types)
    jax.block_until_ready(next_positions)

    assert next_positions.shape == (N, DIM), next_positions.shape
    assert bool(jnp.all(jnp.isfinite(next_positions)))
    print("KERNEL_OK")
</pallas_src>

<mosaic_0001>
module attributes {stable_mosaic.version = 11 : i64} {
  func.func @_fused_mlp_kernel(%arg0: i32, %arg1: memref<64x30xf32, #tpu.memory_space<vmem>>, %arg2: memref<30x32xf32, #tpu.memory_space<vmem>>, %arg3: memref<1x32xf32, #tpu.memory_space<vmem>>, %arg4: memref<32x32xf32, #tpu.memory_space<vmem>>, %arg5: memref<1x32xf32, #tpu.memory_space<vmem>>, %arg6: memref<32x32xf32, #tpu.memory_space<vmem>>, %arg7: memref<1x32xf32, #tpu.memory_space<vmem>>, %arg8: memref<1x32xf32, #tpu.memory_space<vmem>>, %arg9: memref<1x32xf32, #tpu.memory_space<vmem>>, %arg10: memref<64x32xf32, #tpu.memory_space<vmem>>) attributes {dimension_semantics = [#tpu.dimension_semantics<parallel>], iteration_bounds = array<i64: 1>, scalar_prefetch = 0 : i64, scratch_operands = 0 : i64, tpu.core_type = #tpu.core_type<tc>, window_params = [{transform_indices = @transform_0, window_bounds = array<i64: 64, 30>}, {pipeline_mode = #tpu.pipeline_mode<synchronous>, transform_indices = @transform_1, window_bounds = array<i64: 30, 32>}, {pipeline_mode = #tpu.pipeline_mode<synchronous>, transform_indices = @transform_2, window_bounds = array<i64: 1, 32>}, {pipeline_mode = #tpu.pipeline_mode<synchronous>, transform_indices = @transform_3, window_bounds = array<i64: 32, 32>}, {pipeline_mode = #tpu.pipeline_mode<synchronous>, transform_indices = @transform_4, window_bounds = array<i64: 1, 32>}, {pipeline_mode = #tpu.pipeline_mode<synchronous>, transform_indices = @transform_5, window_bounds = array<i64: 32, 32>}, {pipeline_mode = #tpu.pipeline_mode<synchronous>, transform_indices = @transform_6, window_bounds = array<i64: 1, 32>}, {pipeline_mode = #tpu.pipeline_mode<synchronous>, transform_indices = @transform_7, window_bounds = array<i64: 1, 32>}, {pipeline_mode = #tpu.pipeline_mode<synchronous>, transform_indices = @transform_8, window_bounds = array<i64: 1, 32>}, {transform_indices = @transform_9, window_bounds = array<i64: 64, 32>}]} {
    %c0 = arith.constant 0 : index
    %c0_0 = arith.constant 0 : index
    %0 = vector.load %arg1[%c0, %c0_0] : memref<64x30xf32, #tpu.memory_space<vmem>>, vector<64x30xf32>
    %c0_1 = arith.constant 0 : index
    %c0_2 = arith.constant 0 : index
    %1 = vector.load %arg2[%c0_1, %c0_2] : memref<30x32xf32, #tpu.memory_space<vmem>>, vector<30x32xf32>
    %c0_3 = arith.constant 0 : index
    %c0_4 = arith.constant 0 : index
    %2 = vector.load %arg3[%c0_3, %c0_4] : memref<1x32xf32, #tpu.memory_space<vmem>>, vector<1x32xf32>
    %cst = arith.constant dense<0.000000e+00> : vector<64x32xf32>
    %3 = tpu.matmul %0, %1, %cst {dimension_numbers = #tpu.dot_dimension_numbers<[1], [0], [0], [1], [0, 0, 1, 1], [], []>} : vector<64x30xf32>, vector<30x32xf32>, vector<64x32xf32> -> vector<64x32xf32>
    %4 = vector.broadcast %2 : vector<1x32xf32> to vector<64x32xf32>
    %5 = arith.addf %3, %4 : vector<64x32xf32>
    %cst_5 = arith.constant 0.000000e+00 : f32
    %6 = vector.broadcast %cst_5 : f32 to vector<64x32xf32>
    %7 = arith.maximumf %5, %6 : vector<64x32xf32>
    %c0_6 = arith.constant 0 : index
    %c0_7 = arith.constant 0 : index
    %8 = vector.load %arg4[%c0_6, %c0_7] : memref<32x32xf32, #tpu.memory_space<vmem>>, vector<32x32xf32>
    %c0_8 = arith.constant 0 : index
    %c0_9 = arith.constant 0 : index
    %9 = vector.load %arg5[%c0_8, %c0_9] : memref<1x32xf32, #tpu.memory_space<vmem>>, vector<1x32xf32>
    %cst_10 = arith.constant dense<0.000000e+00> : vector<64x32xf32>
    %10 = tpu.matmul %7, %8, %cst_10 {dimension_numbers = #tpu.dot_dimension_numbers<[1], [0], [0], [1], [0, 0, 1, 1], [], []>} : vector<64x32xf32>, vector<32x32xf32>, vector<64x32xf32> -> vector<64x32xf32>
    %11 = vector.broadcast %9 : vector<1x32xf32> to vector<64x32xf32>
    %12 = arith.addf %10, %11 : vector<64x32xf32>
    %cst_11 = arith.constant 0.000000e+00 : f32
    %13 = vector.broadcast %cst_11 : f32 to vector<64x32xf32>
    %14 = arith.maximumf %12, %13 : vector<64x32xf32>
    %c0_12 = arith.constant 0 : index
    %c0_13 = arith.constant 0 : index
    %15 = vector.load %arg6[%c0_12, %c0_13] : memref<32x32xf32, #tpu.memory_space<vmem>>, vector<32x32xf32>
    %c0_14 = arith.constant 0 : index
    %c0_15 = arith.constant 0 : index
    %16 = vector.load %arg7[%c0_14, %c0_15] : memref<1x32xf32, #tpu.memory_space<vmem>>, vector<1x32xf32>
    %cst_16 = arith.constant dense<0.000000e+00> : vector<64x32xf32>
    %17 = tpu.matmul %14, %15, %cst_16 {dimension_numbers = #tpu.dot_dimension_numbers<[1], [0], [0], [1], [0, 0, 1, 1], [], []>} : vector<64x32xf32>, vector<32x32xf32>, vector<64x32xf32> -> vector<64x32xf32>
    %18 = vector.broadcast %16 : vector<1x32xf32> to vector<64x32xf32>
    %19 = arith.addf %17, %18 : vector<64x32xf32>
    %c0_17 = arith.constant 0 : index
    %c0_18 = arith.constant 0 : index
    %20 = vector.load %arg8[%c0_17, %c0_18] : memref<1x32xf32, #tpu.memory_space<vmem>>, vector<1x32xf32>
    %c0_19 = arith.constant 0 : index
    %c0_20 = arith.constant 0 : index
    %21 = vector.load %arg9[%c0_19, %c0_20] : memref<1x32xf32, #tpu.memory_space<vmem>>, vector<1x32xf32>
    %cst_21 = arith.constant dense<0.000000e+00> : vector<64xf32>
    %22 = vector.multi_reduction <add>, %19, %cst_21 [1] : vector<64x32xf32> to vector<64xf32>
    %23 = vector.shape_cast %22 : vector<64xf32> to vector<64x1xf32>
    %cst_22 = arith.constant 3.200000e+01 : f32
    %24 = vector.broadcast %cst_22 : f32 to vector<64x1xf32>
    %25 = arith.divf %23, %24 : vector<64x1xf32>
    %26 = vector.broadcast %25 : vector<64x1xf32> to vector<64x32xf32>
    %27 = arith.subf %19, %26 : vector<64x32xf32>
    %28 = arith.mulf %27, %27 : vector<64x32xf32>
    %cst_23 = arith.constant dense<0.000000e+00> : vector<64xf32>
    %29 = vector.multi_reduction <add>, %28, %cst_23 [1] : vector<64x32xf32> to vector<64xf32>
    %30 = vector.shape_cast %29 : vector<64xf32> to vector<64x1xf32>
    %cst_24 = arith.constant 3.200000e+01 : f32
    %31 = vector.broadcast %cst_24 : f32 to vector<64x1xf32>
    %32 = arith.divf %30, %31 : vector<64x1xf32>
    %33 = vector.broadcast %25 : vector<64x1xf32> to vector<64x32xf32>
    %34 = arith.subf %19, %33 : vector<64x32xf32>
    %cst_25 = arith.constant 9.99999974E-6 : f32
    %35 = vector.broadcast %cst_25 : f32 to vector<64x1xf32>
    %36 = arith.addf %32, %35 : vector<64x1xf32>
    %37 = math.rsqrt %36 : vector<64x1xf32>
    %38 = vector.broadcast %37 : vector<64x1xf32> to vector<64x32xf32>
    %39 = arith.mulf %34, %38 : vector<64x32xf32>
    %40 = vector.broadcast %20 : vector<1x32xf32> to vector<64x32xf32>
    %41 = arith.mulf %39, %40 : vector<64x32xf32>
    %42 = vector.broadcast %21 : vector<1x32xf32> to vector<64x32xf32>
    %43 = arith.addf %41, %42 : vector<64x32xf32>
    %c0_26 = arith.constant 0 : index
    %c0_27 = arith.constant 0 : index
    %44 = vector.load %arg10[%c0_26, %c0_27] : memref<64x32xf32, #tpu.memory_space<vmem>>, vector<64x32xf32>
    tpu.vector_store %arg10[%c0_26, %c0_27], %43 {strides = array<i32>} : memref<64x32xf32, #tpu.memory_space<vmem>>, vector<64x32xf32>,
    return
  }
  func.func @transform_0(%arg0: i32) -> (i32, i32) {
    %c0_i32 = arith.constant 0 : i32
    %c0_i32_0 = arith.constant 0 : i32
    return %arg0, %c0_i32 : i32, i32
  }
  func.func @transform_1(%arg0: i32) -> (i32, i32) {
    %c0_i32 = arith.constant 0 : i32
    %c0_i32_0 = arith.constant 0 : i32
    %c0_i32_1 = arith.constant 0 : i32
    return %c0_i32, %c0_i32_0 : i32, i32
  }
  func.func @transform_2(%arg0: i32) -> (i32, i32) {
    %c0_i32 = arith.constant 0 : i32
    %c0_i32_0 = arith.constant 0 : i32
    %c0_i32_1 = arith.constant 0 : i32
    return %c0_i32, %c0_i32_0 : i32, i32
  }
  func.func @transform_3(%arg0: i32) -> (i32, i32) {
    %c0_i32 = arith.constant 0 : i32
    %c0_i32_0 = arith.constant 0 : i32
    %c0_i32_1 = arith.constant 0 : i32
    return %c0_i32, %c0_i32_0 : i32, i32
  }
  func.func @transform_4(%arg0: i32) -> (i32, i32) {
    %c0_i32 = arith.constant 0 : i32
    %c0_i32_0 = arith.constant 0 : i32
    %c0_i32_1 = arith.constant 0 : i32
    return %c0_i32, %c0_i32_0 : i32, i32
  }
  func.func @transform_5(%arg0: i32) -> (i32, i32) {
    %c0_i32 = arith.constant 0 : i32
    %c0_i32_0 = arith.constant 0 : i32
    %c0_i32_1 = arith.constant 0 : i32
    return %c0_i32, %c0_i32_0 : i32, i32
  }
  func.func @transform_6(%arg0: i32) -> (i32, i32) {
    %c0_i32 = arith.constant 0 : i32
    %c0_i32_0 = arith.constant 0 : i32
    %c0_i32_1 = arith.constant 0 : i32
    return %c0_i32, %c0_i32_0 : i32, i32
  }
  func.func @transform_7(%arg0: i32) -> (i32, i32) {
    %c0_i32 = arith.constant 0 : i32
    %c0_i32_0 = arith.constant 0 : i32
    %c0_i32_1 = arith.constant 0 : i32
    return %c0_i32, %c0_i32_0 : i32, i32
  }
  func.func @transform_8(%arg0: i32) -> (i32, i32) {
    %c0_i32 = arith.constant 0 : i32
    %c0_i32_0 = arith.constant 0 : i32
    %c0_i32_1 = arith.constant 0 : i32
    return %c0_i32, %c0_i32_0 : i32, i32
  }
  func.func @transform_9(%arg0: i32) -> (i32, i32) {
    %c0_i32 = arith.constant 0 : i32
    %c0_i32_0 = arith.constant 0 : i32
    return %arg0, %c0_i32 : i32, i32
  }
}

</mosaic_0001>

<llo_original>
// kernel: tpu_custom_call.1
$region0: #{tpu_custom_call.1}
  #allocation0 [shape = 'u32[]', space=smem, size = 0x4, offset = 0x4, fixed_abs, tag = 'smem constant byte address 0x4 - core index']
  #allocation1 [shape = 'u32[72,128]{1,0:T(1,128)}', space=vmem, size = 0x9000, scoped, tag = 'internal scratch']
  %s0 = inlined_call_operand.vmem [shape: f32[64,30], index: 0, kind: input, shape index: {}]
  %s1 = inlined_call_operand.vmem [shape: f32[30,32], index: 1, kind: input, shape index: {}]
  %s2 = inlined_call_operand.vmem [shape: f32[1,32], index: 2, kind: input, shape index: {}]
  %s3 = inlined_call_operand.vmem [shape: f32[32,32], index: 3, kind: input, shape index: {}]
  %s4 = inlined_call_operand.vmem [shape: f32[1,32], index: 4, kind: input, shape index: {}]
  %s5 = inlined_call_operand.vmem [shape: f32[32,32], index: 5, kind: input, shape index: {}]
  %s6 = inlined_call_operand.vmem [shape: f32[1,32], index: 6, kind: input, shape index: {}]
  %s7 = inlined_call_operand.vmem [shape: f32[1,32], index: 7, kind: input, shape index: {}]
  %s8 = inlined_call_operand.vmem [shape: f32[1,32], index: 8, kind: input, shape index: {}]
  %s9 = inlined_call_operand.vmem [shape: f32[64,32], index: 9, kind: output, shape index: {}]
  %s10 = sld [smem:[#allocation0]]
  $region46: #{tpu_custom_call.1} parent=0
    _
  %s12 = ssub.s32 1, %s10
  %s13 = scalar_select 0, %s12, %s10
  // Predicated region
  $region2: #{tpu_custom_call.1} parent=0 // pred_check
    _
  $region3: #{tpu_custom_call.1} parent=0 // pred_check_branch
    %15 = sbr.rel (0) target = $region5
  $region4: #{tpu_custom_call.1} parent=0 // pred_region
    _
  $region5: #{tpu_custom_call.1} parent=0 // pred_fallthru
    _
  // Predicated region
  $region6: #{tpu_custom_call.1} parent=0 // pred_check
    _
  $region7: #{tpu_custom_call.1} parent=0 // pred_check_branch
    %17 = sbr.rel (0) target = $region9
  $region8: #{tpu_custom_call.1} parent=0 // pred_region
    _
  $region9: #{tpu_custom_call.1} parent=0 // pred_fallthru
    _
  // Predicated region
  $region10: #{tpu_custom_call.1} parent=0 // pred_check
    _
  $region11: #{tpu_custom_call.1} parent=0 // pred_check_branch
    %19 = sbr.rel (0) target = $region13
  $region12: #{tpu_custom_call.1} parent=0 // pred_region
    _
  $region13: #{tpu_custom_call.1} parent=0 // pred_fallthru
    _
  // Predicated region
  $region14: #{tpu_custom_call.1} parent=0 // pred_check
    _
  $region15: #{tpu_custom_call.1} parent=0 // pred_check_branch
    %21 = sbr.rel (0) target = $region17
  $region16: #{tpu_custom_call.1} parent=0 // pred_region
    _
  $region17: #{tpu_custom_call.1} parent=0 // pred_fallthru
    _
  // Predicated region
  $region18: #{tpu_custom_call.1} parent=0 // pred_check
    _
  $region19: #{tpu_custom_call.1} parent=0 // pred_check_branch
    %23 = sbr.rel (0) target = $region21
  $region20: #{tpu_custom_call.1} parent=0 // pred_region
    _
  $region21: #{tpu_custom_call.1} parent=0 // pred_fallthru
    _
  // Predicated region
  $region22: #{tpu_custom_call.1} parent=0 // pred_check
    _
  $region23: #{tpu_custom_call.1} parent=0 // pred_check_branch
    %25 = sbr.rel (0) target = $region25
  $region24: #{tpu_custom_call.1} parent=0 // pred_region
    _
  $region25: #{tpu_custom_call.1} parent=0 // pred_fallthru
    _
  // Predicated region
  $region26: #{tpu_custom_call.1} parent=0 // pred_check
    _
  $region27: #{tpu_custom_call.1} parent=0 // pred_check_branch
    %27 = sbr.rel (0) target = $region29
  $region28: #{tpu_custom_call.1} parent=0 // pred_region
    _
  $region29: #{tpu_custom_call.1} parent=0 // pred_fallthru
    _
  // Predicated region
  $region30: #{tpu_custom_call.1} parent=0 // pred_check
    _
  $region31: #{tpu_custom_call.1} parent=0 // pred_check_branch
    %29 = sbr.rel (0) target = $region33
  $region32: #{tpu_custom_call.1} parent=0 // pred_region
    _
  $region33: #{tpu_custom_call.1} parent=0 // pred_fallthru
    _
  // Predicated region
  $region34: #{tpu_custom_call.1} parent=0 // pred_check
    _
  $region35: #{tpu_custom_call.1} parent=0 // pred_check_branch
    %31 = sbr.rel (0) target = $region37
  $region36: #{tpu_custom_call.1} parent=0 // pred_region
    _
  $region37: #{tpu_custom_call.1} parent=0 // pred_fallthru
    _
  %v32 = vld [vmem:[%s0] sm:$0xff]
  %v33 = vld [vmem:[%s0 + $0x8] sm:$0xff]
  %v34 = vld [vmem:[%s0 + $0x10] sm:$0xff]
  %v35 = vld [vmem:[%s0 + $0x18] sm:$0xff]
  %v36 = vld [vmem:[%s0 + $0x20] sm:$0xff]
  %v37 = vld [vmem:[%s0 + $0x28] sm:$0xff]
  %v38 = vld [vmem:[%s0 + $0x30] sm:$0xff]
  %v39 = vld [vmem:[%s0 + $0x38] sm:$0xff]
  %v40 = vld [vmem:[%s1] sm:$0xff]
  %v41 = vld [vmem:[%s1 + $0x8] sm:$0xff]
  %v42 = vld [vmem:[%s1 + $0x10] sm:$0xff]
  %v43 = vld [vmem:[%s1 + $0x18] sm:$0x3f]
  %v44 = vld [vmem:[%s2] sm:$0x1]
  %v46 = vperm.slane %v44, 0
  %vm48 = vcmask 244736
  %v50 = vsel %vm48, %v32, 0
  %v53 = vsel %vm48, %v33, 0
  %v56 = vsel %vm48, %v34, 0
  %v59 = vsel %vm48, %v35, 0
  %v62 = vsel %vm48, %v36, 0
  %v65 = vsel %vm48, %v37, 0
  %v68 = vsel %vm48, %v38, 0
  %v71 = vsel %vm48, %v39, 0
  %vm73 = vcmask 1045504
  %v75 = vsel %vm73, %v43, 0
  %77 = vmatpush.msra.mxu0 0.0
  %78 = vmatpush.msra.mxu0 0.0
  %79 = vmatpush.msra.mxu0 0.0
  %80 = vmatpush.msra.mxu0 0.0
  %81 = vmatpush.msra.mxu0 0.0
  %82 = vmatpush.msra.mxu0 0.0
  %83 = vmatpush.msra.mxu0 0.0
  %84 = vmatpush.msra.mxu0 0.0
  %85 = vmatpush.msra.mxu0 0.0
  %86 = vmatpush.msra.mxu0 0.0
  %87 = vmatpush.msra.mxu0 0.0
  %88 = vmatpush.msra.mxu0 0.0
  %89 = vmatpush.msra.mxu0 %v75
  %90 = vmatpush.msra.mxu0 %v42
  %91 = vmatpush.msra.mxu0 %v41
  %92 = vmatpush.msra.mxu0 %v40
  %93 = vmatmul.f32.gmra.mxu0 %v50
  %v94 = vpop.f32.mrf.mxu0
  %v95 = vadd.f32 %v46, %v94
  %96 = vmatmul.f32.gmra.mxu0 %v53
  %v97 = vpop.f32.mrf.mxu0
  %v98 = vadd.f32 %v46, %v97
  %99 = vmatmul.f32.gmra.mxu0 %v56
  %v100 = vpop.f32.mrf.mxu0
  %v101 = vadd.f32 %v46, %v100
  %102 = vmatmul.f32.gmra.mxu0 %v59
  %v103 = vpop.f32.mrf.mxu0
  %v104 = vadd.f32 %v46, %v103
  %105 = vmatmul.f32.gmra.mxu0 %v62
  %v106 = vpop.f32.mrf.mxu0
  %v107 = vadd.f32 %v46, %v106
  %108 = vmatmul.f32.gmra.mxu0 %v65
  %v109 = vpop.f32.mrf.mxu0
  %v110 = vadd.f32 %v46, %v109
  %111 = vmatmul.f32.gmra.mxu0 %v68
  %v112 = vpop.f32.mrf.mxu0
  %v113 = vadd.f32 %v46, %v112
  %114 = vmatmul.f32.gmra.mxu0 %v71
  %v115 = vpop.f32.mrf.mxu0
  %v116 = vadd.f32 %v46, %v115
  %117 = vdwg.mxu0
  %v118 = vmax.f32 %v95, 0.0
  %v119 = vmax.f32 %v98, 0.0
  %v120 = vmax.f32 %v101, 0.0
  %v121 = vmax.f32 %v104, 0.0
  %v122 = vmax.f32 %v107, 0.0
  %v123 = vmax.f32 %v110, 0.0
  %v124 = vmax.f32 %v113, 0.0
  %v125 = vmax.f32 %v116, 0.0
  %v126 = vld [vmem:[%s3] sm:$0xff]
  %v127 = vld [vmem:[%s3 + $0x8] sm:$0xff]
  %v128 = vld [vmem:[%s3 + $0x10] sm:$0xff]
  %v129 = vld [vmem:[%s3 + $0x18] sm:$0xff]
  %v130 = vld [vmem:[%s4] sm:$0x1]
  %v132 = vperm.slane %v130, 0
  %vm134 = vcmask 261120
  %v136 = vsel %vm134, %v118, 0
  %v139 = vsel %vm134, %v119, 0
  %v142 = vsel %vm134, %v120, 0
  %v145 = vsel %vm134, %v121, 0
  %v148 = vsel %vm134, %v122, 0
  %v151 = vsel %vm134, %v123, 0
  %v154 = vsel %vm134, %v124, 0
  %v157 = vsel %vm134, %v125, 0
  %159 = vmatpush.msra.mxu0 0.0
  %160 = vmatpush.msra.mxu0 0.0
  %161 = vmatpush.msra.mxu0 0.0
  %162 = vmatpush.msra.mxu0 0.0
  %163 = vmatpush.msra.mxu0 0.0
  %164 = vmatpush.msra.mxu0 0.0
  %165 = vmatpush.msra.mxu0 0.0
  %166 = vmatpush.msra.mxu0 0.0
  %167 = vmatpush.msra.mxu0 0.0
  %168 = vmatpush.msra.mxu0 0.0
  %169 = vmatpush.msra.mxu0 0.0
  %170 = vmatpush.msra.mxu0 0.0
  %171 = vmatpush.msra.mxu0 %v129
  %172 = vmatpush.msra.mxu0 %v128
  %173 = vmatpush.msra.mxu0 %v127
  %174 = vmatpush.msra.mxu0 %v126
  %175 = vmatmul.f32.gmra.mxu0 %v136
  %v176 = vpop.f32.mrf.mxu0
  %v177 = vadd.f32 %v132, %v176
  %178 = vmatmul.f32.gmra.mxu0 %v139
  %v179 = vpop.f32.mrf.mxu0
  %v180 = vadd.f32 %v132, %v179
  %181 = vmatmul.f32.gmra.mxu0 %v142
  %v182 = vpop.f32.mrf.mxu0
  %v183 = vadd.f32 %v132, %v182
  %184 = vmatmul.f32.gmra.mxu0 %v145
  %v185 = vpop.f32.mrf.mxu0
  %v186 = vadd.f32 %v132, %v185
  %187 = vmatmul.f32.gmra.mxu0 %v148
  %v188 = vpop.f32.mrf.mxu0
  %v189 = vadd.f32 %v132, %v188
  %190 = vmatmul.f32.gmra.mxu0 %v151
  %v191 = vpop.f32.mrf.mxu0
  %v192 = vadd.f32 %v132, %v191
  %193 = vmatmul.f32.gmra.mxu0 %v154
  %v194 = vpop.f32.mrf.mxu0
  %v195 = vadd.f32 %v132, %v194
  %196 = vmatmul.f32.gmra.mxu0 %v157
  %v197 = vpop.f32.mrf.mxu0
  %v198 = vadd.f32 %v132, %v197
  %199 = vdwg.mxu0
  %v200 = vmax.f32 %v177, 0.0
  %v201 = vmax.f32 %v180, 0.0
  %v202 = vmax.f32 %v183, 0.0
  %v203 = vmax.f32 %v186, 0.0
  %v204 = vmax.f32 %v189, 0.0
  %v205 = vmax.f32 %v192, 0.0
  %v206 = vmax.f32 %v195, 0.0
  %v207 = vmax.f32 %v198, 0.0
  %v208 = vld [vmem:[%s5] sm:$0xff]
  %v209 = vld [vmem:[%s5 + $0x8] sm:$0xff]
  %v210 = vld [vmem:[%s5 + $0x10] sm:$0xff]
  %v211 = vld [vmem:[%s5 + $0x18] sm:$0xff]
  %v212 = vld [vmem:[%s6] sm:$0x1]
  %v214 = vperm.slane %v212, 0
  %v217 = vsel %vm134, %v200, 0
  %v220 = vsel %vm134, %v201, 0
  %v223 = vsel %vm134, %v202, 0
  %v226 = vsel %vm134, %v203, 0
  %v229 = vsel %vm134, %v204, 0
  %v232 = vsel %vm134, %v205, 0
  %v235 = vsel %vm134, %v206, 0
  %v238 = vsel %vm134, %v207, 0
  %240 = vmatpush.msra.mxu0 0.0
  %241 = vmatpush.msra.mxu0 0.0
  %242 = vmatpush.msra.mxu0 0.0
  %243 = vmatpush.msra.mxu0 0.0
  %244 = vmatpush.msra.mxu0 0.0
  %245 = vmatpush.msra.mxu0 0.0
  %246 = vmatpush.msra.mxu0 0.0
  %247 = vmatpush.msra.mxu0 0.0
  %248 = vmatpush.msra.mxu0 0.0
  %249 = vmatpush.msra.mxu0 0.0
  %250 = vmatpush.msra.mxu0 0.0
  %251 = vmatpush.msra.mxu0 0.0
  %252 = vmatpush.msra.mxu0 %v211
  %253 = vmatpush.msra.mxu0 %v210
  %254 = vmatpush.msra.mxu0 %v209
  %255 = vmatpush.msra.mxu0 %v208
  %256 = vmatmul.f32.gmra.mxu0 %v217
  %v257 = vpop.f32.mrf.mxu0
  %v258 = vadd.f32 %v214, %v257
  %259 = vmatmul.f32.gmra.mxu0 %v220
  %v260 = vpop.f32.mrf.mxu0
  %v261 = vadd.f32 %v214, %v260
  %262 = vmatmul.f32.gmra.mxu0 %v223
  %v263 = vpop.f32.mrf.mxu0
  %v264 = vadd.f32 %v214, %v263
  %265 = vmatmul.f32.gmra.mxu0 %v226
  %v266 = vpop.f32.mrf.mxu0
  %v267 = vadd.f32 %v214, %v266
  %268 = vmatmul.f32.gmra.mxu0 %v229
  %v269 = vpop.f32.mrf.mxu0
  %v270 = vadd.f32 %v214, %v269
  %271 = vmatmul.f32.gmra.mxu0 %v232
  %v272 = vpop.f32.mrf.mxu0
  %v273 = vadd.f32 %v214, %v272
  %274 = vmatmul.f32.gmra.mxu0 %v235
  %v275 = vpop.f32.mrf.mxu0
  %v276 = vadd.f32 %v214, %v275
  %277 = vmatmul.f32.gmra.mxu0 %v238
  %v278 = vpop.f32.mrf.mxu0
  %v279 = vadd.f32 %v214, %v278
  %280 = vdwg.mxu0
  %v281 = vld [vmem:[%s7] sm:$0x1]
  %v282 = vld [vmem:[%s8] sm:$0x1]
  %v283 = vsel %vm134, %v258, 0.0
  %284 = vadd.xlane.f32.xlu0 %v283
  %v285 = vpop.xlane.xlu0 %284
  %v286 = vsel %vm134, %v261, 0.0
  %287 = vadd.xlane.f32.xlu0 %v286
  %v288 = vpop.xlane.xlu0 %287
  %v289 = vsel %vm134, %v264, 0.0
  %290 = vadd.xlane.f32.xlu0 %v289
  %v291 = vpop.xlane.xlu0 %290
  %v292 = vsel %vm134, %v267, 0.0
  %293 = vadd.xlane.f32.xlu0 %v292
  %v294 = vpop.xlane.xlu0 %293
  %v295 = vsel %vm134, %v270, 0.0
  %296 = vadd.xlane.f32.xlu0 %v295
  %v297 = vpop.xlane.xlu0 %296
  %v298 = vsel %vm134, %v273, 0.0
  %299 = vadd.xlane.f32.xlu0 %v298
  %v300 = vpop.xlane.xlu0 %299
  %v301 = vsel %vm134, %v276, 0.0
  %302 = vadd.xlane.f32.xlu0 %v301
  %v303 = vpop.xlane.xlu0 %302
  %v304 = vsel %vm134, %v279, 0.0
  %305 = vadd.xlane.f32.xlu0 %v304
  %v306 = vpop.xlane.xlu0 %305
  %v307 = vrcp.pop 32.0
  %v308 = vmul.f32 32.0, %v307
  %v309 = vsub.f32 1.0, %v308
  %v310 = vmul.f32 %v307, %v309
  %v311 = vadd.f32 %v307, %v310
  %vm312 = vweird.f32 %v307
  %v313 = vsel %vm312, %v307, %v311
  %v314 = vmul.f32 %v285, %v313
  %v315 = vmul.f32 %v288, %v313
  %v316 = vmul.f32 %v291, %v313
  %v317 = vmul.f32 %v294, %v313
  %v318 = vmul.f32 %v297, %v313
  %v319 = vmul.f32 %v300, %v313
  %v320 = vmul.f32 %v303, %v313
  %v321 = vmul.f32 %v306, %v313
  %v322 = vsub.f32 %v258, %v314
  %v323 = vsub.f32 %v261, %v315
  %v324 = vsub.f32 %v264, %v316
  %v325 = vsub.f32 %v267, %v317
  %v326 = vsub.f32 %v270, %v318
  %v327 = vsub.f32 %v273, %v319
  %v328 = vsub.f32 %v276, %v320
  %v329 = vsub.f32 %v279, %v321
  %v330 = vmul.f32 %v322, %v322
  %v331 = vmul.f32 %v323, %v323
  %v332 = vmul.f32 %v324, %v324
  %v333 = vmul.f32 %v325, %v325
  %v334 = vmul.f32 %v326, %v326
  %v335 = vmul.f32 %v327, %v327
  %v336 = vmul.f32 %v328, %v328
  %v337 = vmul.f32 %v329, %v329
  %v338 = vsel %vm134, %v330, 0.0
  %339 = vadd.xlane.f32.xlu0 %v338
  %v340 = vpop.xlane.xlu0 %339
  %v341 = vsel %vm134, %v331, 0.0
  %342 = vadd.xlane.f32.xlu0 %v341
  %v343 = vpop.xlane.xlu0 %342
  %v344 = vsel %vm134, %v332, 0.0
  %345 = vadd.xlane.f32.xlu0 %v344
  %v346 = vpop.xlane.xlu0 %345
  %v347 = vsel %vm134, %v333, 0.0
  %348 = vadd.xlane.f32.xlu0 %v347
  %v349 = vpop.xlane.xlu0 %348
  %v350 = vsel %vm134, %v334, 0.0
  %351 = vadd.xlane.f32.xlu0 %v350
  %v352 = vpop.xlane.xlu0 %351
  %v353 = vsel %vm134, %v335, 0.0
  %354 = vadd.xlane.f32.xlu0 %v353
  %v355 = vpop.xlane.xlu0 %354
  %v356 = vsel %vm134, %v336, 0.0
  %357 = vadd.xlane.f32.xlu0 %v356
  %v358 = vpop.xlane.xlu0 %357
  %v359 = vsel %vm134, %v337, 0.0
  %360 = vadd.xlane.f32.xlu0 %v359
  %v361 = vpop.xlane.xlu0 %360
  %v362 = vmul.f32 %v340, %v313
  %v363 = vmul.f32 %v343, %v313
  %v364 = vmul.f32 %v346, %v313
  %v365 = vmul.f32 %v349, %v313
  %v366 = vmul.f32 %v352, %v313
  %v367 = vmul.f32 %v355, %v313
  %v368 = vmul.f32 %v358, %v313
  %v369 = vmul.f32 %v361, %v313
  %v370 = vadd.f32 %v362, 1e-05
  %v371 = vadd.f32 %v363, 1e-05
  %v372 = vadd.f32 %v364, 1e-05
  %v373 = vadd.f32 %v365, 1e-05
  %v374 = vadd.f32 %v366, 1e-05
  %v375 = vadd.f32 %v367, 1e-05
  %v376 = vadd.f32 %v368, 1e-05
  %v377 = vadd.f32 %v369, 1e-05
  %v378 = vrsqrt.pop %v370
  %v379 = vmul.f32 %v378, %v370
  %v380 = vmul.f32 %v379, %v378
  %v381 = vmul.f32 0.5, %v380
  %v382 = vsub.f32 1.5, %v381
  %v383 = vmul.f32 %v378, %v382
  %vm384 = vweird.f32 %v370
  %vm385 = vweird.f32 %v378
  %vm386 = vmor %vm384, %vm385
  %v387 = vsel %vm386, %v378, %v383
  %v388 = vrsqrt.pop %v371
  %v389 = vmul.f32 %v388, %v371
  %v390 = vmul.f32 %v389, %v388
  %v391 = vmul.f32 0.5, %v390
  %v392 = vsub.f32 1.5, %v391
  %v393 = vmul.f32 %v388, %v392
  %vm394 = vweird.f32 %v371
  %vm395 = vweird.f32 %v388
  %vm396 = vmor %vm394, %vm395
  %v397 = vsel %vm396, %v388, %v393
  %v398 = vrsqrt.pop %v372
  %v399 = vmul.f32 %v398, %v372
  %v400 = vmul.f32 %v399, %v398
  %v401 = vmul.f32 0.5, %v400
  %v402 = vsub.f32 1.5, %v401
  %v403 = vmul.f32 %v398, %v402
  %vm404 = vweird.f32 %v372
  %vm405 = vweird.f32 %v398
  %vm406 = vmor %vm404, %vm405
  %v407 = vsel %vm406, %v398, %v403
  %v408 = vrsqrt.pop %v373
  %v409 = vmul.f32 %v408, %v373
  %v410 = vmul.f32 %v409, %v408
  %v411 = vmul.f32 0.5, %v410
  %v412 = vsub.f32 1.5, %v411
  %v413 = vmul.f32 %v408, %v412
  %vm414 = vweird.f32 %v373
  %vm415 = vweird.f32 %v408
  %vm416 = vmor %vm414, %vm415
  %v417 = vsel %vm416, %v408, %v413
  %v418 = vrsqrt.pop %v374
  %v419 = vmul.f32 %v418, %v374
  %v420 = vmul.f32 %v419, %v418
  %v421 = vmul.f32 0.5, %v420
  %v422 = vsub.f32 1.5, %v421
  %v423 = vmul.f32 %v418, %v422
  %vm424 = vweird.f32 %v374
  %vm425 = vweird.f32 %v418
  %vm426 = vmor %vm424, %vm425
  %v427 = vsel %vm426, %v418, %v423
  %v428 = vrsqrt.pop %v375
  %v429 = vmul.f32 %v428, %v375
  %v430 = vmul.f32 %v429, %v428
  %v431 = vmul.f32 0.5, %v430
  %v432 = vsub.f32 1.5, %v431
  %v433 = vmul.f32 %v428, %v432
  %vm434 = vweird.f32 %v375
  %vm435 = vweird.f32 %v428
  %vm436 = vmor %vm434, %vm435
  %v437 = vsel %vm436, %v428, %v433
  %v438 = vrsqrt.pop %v376
  %v439 = vmul.f32 %v438, %v376
  %v440 = vmul.f32 %v439, %v438
  %v441 = vmul.f32 0.5, %v440
  %v442 = vsub.f32 1.5, %v441
  %v443 = vmul.f32 %v438, %v442
  %vm444 = vweird.f32 %v376
  %vm445 = vweird.f32 %v438
  %vm446 = vmor %vm444, %vm445
  %v447 = vsel %vm446, %v438, %v443
  %v448 = vrsqrt.pop %v377
  %v449 = vmul.f32 %v448, %v377
  %v450 = vmul.f32 %v449, %v448
  %v451 = vmul.f32 0.5, %v450
  %v452 = vsub.f32 1.5, %v451
  %v453 = vmul.f32 %v448, %v452
  %vm454 = vweird.f32 %v377
  %vm455 = vweird.f32 %v448
  %vm456 = vmor %vm454, %vm455
  %v457 = vsel %vm456, %v448, %v453
  %v458 = vmul.f32 %v322, %v387
  %v459 = vmul.f32 %v323, %v397
  %v460 = vmul.f32 %v324, %v407
  %v461 = vmul.f32 %v325, %v417
  %v462 = vmul.f32 %v326, %v427
  %v463 = vmul.f32 %v327, %v437
  %v464 = vmul.f32 %v328, %v447
  %v465 = vmul.f32 %v329, %v457
  %v467 = vperm.slane %v281, 0
  %v469 = vmul.f32 %v458, %v467
  %v470 = vmul.f32 %v459, %v467
  %v471 = vmul.f32 %v460, %v467
  %v472 = vmul.f32 %v461, %v467
  %v473 = vmul.f32 %v462, %v467
  %v474 = vmul.f32 %v463, %v467
  %v475 = vmul.f32 %v464, %v467
  %v476 = vmul.f32 %v465, %v467
  %v478 = vperm.slane %v282, 0
  %v480 = vadd.f32 %v469, %v478
  %v481 = vadd.f32 %v470, %v478
  %v482 = vadd.f32 %v471, %v478
  %v483 = vadd.f32 %v472, %v478
  %v484 = vadd.f32 %v473, %v478
  %v485 = vadd.f32 %v474, %v478
  %v486 = vadd.f32 %v475, %v478
  %v487 = vadd.f32 %v476, %v478
  %488 = vst.msk [vmem:[%s9] sm:$0xff] %vm134, %v480
  %489 = vst.msk [vmem:[%s9 + $0x8] sm:$0xff] %vm134, %v481
  %490 = vst.msk [vmem:[%s9 + $0x10] sm:$0xff] %vm134, %v482
  %491 = vst.msk [vmem:[%s9 + $0x18] sm:$0xff] %vm134, %v483
  %492 = vst.msk [vmem:[%s9 + $0x20] sm:$0xff] %vm134, %v484
  %493 = vst.msk [vmem:[%s9 + $0x28] sm:$0xff] %vm134, %v485
  %494 = vst.msk [vmem:[%s9 + $0x30] sm:$0xff] %vm134, %v486
  %495 = vst.msk [vmem:[%s9 + $0x38] sm:$0xff] %vm134, %v487
  // Predicated region
  $region38: #{tpu_custom_call.1} parent=0 // pred_check
    _
  $region39: #{tpu_custom_call.1} parent=0 // pred_check_branch
    %497 = sbr.rel (0) target = $region41
  $region40: #{tpu_custom_call.1} parent=0 // pred_region
    _
  $region41: #{tpu_custom_call.1} parent=0 // pred_fallthru
    _
  // Predicated region
  $region42: #{tpu_custom_call.1} parent=0 // pred_check
    _
  $region43: #{tpu_custom_call.1} parent=0 // pred_check_branch
    %499 = sbr.rel (0) target = $region45
  $region44: #{tpu_custom_call.1} parent=0 // pred_region
    _
  $region45: #{tpu_custom_call.1} parent=0 // pred_fallthru
    _

</llo_original>
